<compile_context>
chip_gen: v7x
topology: tpu7x:2x2x1
jax: 0.10.0
libtpu: 0.0.40
codegen_flags: <defaults>
</compile_context>

<pallas_src>
import functools

import jax
import jax.numpy as jnp
from jax.experimental import pallas as pl
from jax.experimental.pallas import tpu as pltpu

EPS = 1e-5


# ----------------------------------------------------------------------------
# Fused Pallas kernel.  One grid step = one batch element.  Two bf16 MXU
# matmuls with f32 accumulation; out1 / short_cut never leave VMEM/vregs.
# ----------------------------------------------------------------------------
def _fused_kernel(xcol_ref, w15_ref, b15_ref, w2_ref, b2_ref, o_ref,
                  *, OH, OWC, KH2):
    # ---- stage 1: 5x5 conv1+bn1+relu and 5x5 shortcut conv+bn share one LHS /
    # one MXU matmul (KH1 taps, W taps and W zero-pad are folded into K by the
    # block-Toeplitz weights).  bf16 inputs, f32 accumulation, folded-BN bias.
    acc1 = jnp.dot(xcol_ref[0], w15_ref[...],
                   preferred_element_type=jnp.float32) + b15_ref[...]
    out1 = jnp.maximum(acc1[:, :OWC], 0.0)       # relu(bn1(conv1(x)))  (OH, OWC) f32
    short = acc1[:, OWC:]                        # sc_bn1(sc_conv1(x))  (OH, OWC) f32

    # ---- stage 2: 3x3 conv2 + bn2 + shortcut add + relu.  The H halo (zero
    # pad) is built in-register: per-tap sublane shifts of out1 are
    # lane-concatenated so the KH2 taps fold into a single K = KH2*OWC matmul.
    hpad = (KH2 - 1) // 2
    taps = []
    for kh in range(KH2):                        # static unroll
        off = kh - hpad
        if off < 0:
            t = jnp.concatenate(
                [jnp.zeros((-off, OWC), jnp.float32), out1[:OH + off]], axis=0)
        elif off > 0:
            t = jnp.concatenate(
                [out1[off:], jnp.zeros((off, OWC), jnp.float32)], axis=0)
        else:
            t = out1
        taps.append(t)
    lhs2 = jnp.concatenate(taps, axis=-1).astype(jnp.bfloat16)   # (OH, KH2*OWC)

    acc2 = jnp.dot(lhs2, w2_ref[...], preferred_element_type=jnp.float32)
    o_ref[0] = jnp.maximum(acc2 + b2_ref[...] + short, 0.0).astype(o_ref.dtype)


# ----------------------------------------------------------------------------
# Host-side weight preparation (run ONCE per weight update, not per forward):
# BN folding, block-Toeplitz ("banded") weights, bias tiling, bf16 cast.
# ----------------------------------------------------------------------------
def fold_bn(gamma, beta, mean, var, eps=EPS):
    s = gamma / jnp.sqrt(var + eps)
    return s, beta - mean * s


def _banded_weight(w_hwio, ow, pad):
    """(KH,KW,Cin,Cout) -> (KH, OW*Cin, OW*Cout) block-Toeplitz weight.

    band[kh, wp*Cin+ci, w*Cout+co] = w[kh, wp-w+pad, ci, co] (0 outside band),
    so the W-direction taps AND W zero-padding become part of a single matmul.
    """
    KH, KW, Cin, Cout = w_hwio.shape
    wp = jnp.arange(ow)[None, :, None]
    wo = jnp.arange(ow)[None, None, :]
    kw = jnp.arange(KW)[:, None, None]
    shift = (wp == wo + kw - pad).astype(w_hwio.dtype)            # (KW, OW, OW)
    band = jnp.einsum("kpw,hkic->hpiwc", shift, w_hwio)           # (KH,OW,Cin,OW,Cout)
    return band.reshape(KH, ow * Cin, ow * Cout)


def prepare_gudi_upproj_params(params, owidth):
    """Fold inference BN into the convs, build banded bf16 weights + f32 biases."""
    OW = owidth
    s1, b1 = fold_bn(*params["bn1"])
    s2, b2 = fold_bn(*params["bn2"])
    ssc, bsc = fold_bn(*params["bn_sc"])
    # PyTorch OIHW -> HWIO, folded BN scale applied in f32 BEFORE the bf16 cast.
    w1 = jnp.transpose(params["w1"], (2, 3, 1, 0)).astype(jnp.float32) * s1
    w2 = jnp.transpose(params["w2"], (2, 3, 1, 0)).astype(jnp.float32) * s2
    wsc = jnp.transpose(params["w_sc"], (2, 3, 1, 0)).astype(jnp.float32) * ssc

    KH1, _, Cin, Cout = w1.shape
    KH2 = w2.shape[0]
    pad1 = KH1 // 2

    # conv1 and the 5x5 shortcut conv share one LHS: concatenate their bands
    # along the output-lane axis, then fold the KH taps into the K axis.
    band15 = jnp.concatenate(
        [_banded_weight(w1, OW, pad1), _banded_weight(wsc, OW, pad1)], axis=-1)
    band15 = band15.reshape(KH1 * OW * Cin, 2 * OW * Cout).astype(jnp.bfloat16)
    band2 = _banded_weight(w2, OW, KH2 // 2)
    band2 = band2.reshape(KH2 * OW * Cout, OW * Cout).astype(jnp.bfloat16)

    b15 = jnp.concatenate([jnp.tile(b1, OW), jnp.tile(bsc, OW)]
                          ).reshape(1, 2 * OW * Cout).astype(jnp.float32)
    b2t = jnp.tile(b2, OW).reshape(1, OW * Cout).astype(jnp.float32)
    return {"band15": band15, "b15": b15, "band2": band2, "b2": b2t}


# ----------------------------------------------------------------------------
# Forward wrapper: up-pooling + layout + pallas_call.
# ----------------------------------------------------------------------------
def gudi_upproj_block_forward(x_nchw, prep, oheight, owidth):
    """Matches Gudi_UpProj_Block.forward (inference-mode BatchNorm)."""
    N, Cin, Hin, Win = x_nchw.shape
    OH, OW = oheight, owidth
    band15, b15 = prep["band15"], prep["b15"]
    band2, b2t = prep["band2"], prep["b2"]
    OWC = band2.shape[1]                    # OW * Cout
    Cout = OWC // OW
    KH1 = band15.shape[0] // (OW * Cin)     # 5
    KH2 = band2.shape[0] // OWC             # 3
    pad1 = KH1 // 2                         # 2
    assert OH <= 2 * Hin and OW <= 2 * Win

    # masked nearest-x2 up-pooling + checkerboard mask + crop, scattered straight
    # into an H-halo slab (the W halo/taps live inside the banded weights);
    # channels-last, lane-flattened layout.
    x_nhwc = jnp.transpose(x_nchw, (0, 2, 3, 1)).astype(jnp.float32)
    nh, nw = min(Hin, OH // 2), min(Win, OW // 2)
    xup = jnp.zeros((N, OH + 2 * pad1, OW, Cin), jnp.float32)
    xup = xup.at[:, pad1:pad1 + 2 * nh:2, 0:2 * nw:2, :].set(x_nhwc[:, :nh, :nw, :])
    xflat = xup.reshape(N, OH + 2 * pad1, OW * Cin)

    # im2col over H only: fold the KH1 taps into the contraction dim (bf16 LHS).
    xcol = jnp.stack([xflat[:, kh:kh + OH, :] for kh in range(KH1)], axis=2)
    xcol = xcol.reshape(N, OH, KH1 * OW * Cin).astype(jnp.bfloat16)

    K1 = KH1 * OW * Cin
    K2 = KH2 * OWC
    kernel = functools.partial(_fused_kernel, OH=OH, OWC=OWC, KH2=KH2)

    M = N * OH
    flops = 2 * M * (K1 * 2 * OWC + K2 * OWC)
    bytes_accessed = int(2 * xcol.size + 2 * band15.size + 2 * band2.size
                         + 4 * b15.size + 4 * b2t.size + 4 * M * OWC)

    out_flat = pl.pallas_call(
        kernel,
        out_shape=jax.ShapeDtypeStruct((N, OH, OWC), jnp.float32),
        grid=(N,),
        in_specs=[
            # per-step activation tile: one batch element, pipelined.
            pl.BlockSpec((1, OH, K1), lambda n: (n, 0, 0)),
            # weights / biases: block index never changes -> DMA'd once, resident.
            pl.BlockSpec((K1, 2 * OWC), lambda n: (0, 0)),
            pl.BlockSpec((1, 2 * OWC), lambda n: (0, 0)),
            pl.BlockSpec((K2, OWC), lambda n: (0, 0)),
            pl.BlockSpec((1, OWC), lambda n: (0, 0)),
        ],
        out_specs=pl.BlockSpec((1, OH, OWC), lambda n: (n, 0, 0)),
        compiler_params=pltpu.CompilerParams(
            dimension_semantics=("parallel",),          # megacore on v7x
            vmem_limit_bytes=32 * 1024 * 1024),
        cost_estimate=pl.CostEstimate(flops=flops, transcendentals=0,
                                      bytes_accessed=bytes_accessed),
    )(xcol, band15, b15, band2, b2t)

    # Lane-dense (N, OH, OW*Cout) slab is the natural kernel output; the NCHW
    # transpose below is only for parity with the PyTorch module's API.
    out = out_flat.reshape(N, OH, OW, Cout)
    return jnp.transpose(out, (0, 3, 1, 2))


# ----------------------------------------------------------------------------
# Pure-JAX f32 reference (torch-equivalent up_pooling + lax.conv).
# ----------------------------------------------------------------------------
def up_pooling(x_nchw, oheight, owidth, scale=2):
    up = jnp.repeat(jnp.repeat(x_nchw, scale, axis=2), scale, axis=3)
    if oheight != 0 and owidth != 0:
        up = up[:, :, :oheight, :owidth]
    H, W = up.shape[2], up.shape[3]
    hh = jnp.arange(H)
    ww = jnp.arange(W)
    mh = ((hh % 2 == 0) & (hh < oheight - 1)).astype(up.dtype)
    mw = ((ww % 2 == 0) & (ww < owidth - 1)).astype(up.dtype)
    return up * (mh[:, None] * mw[None, :])


def reference_forward(x_nchw, params, oheight, owidth):
    xu = up_pooling(x_nchw, oheight, owidth)

    def conv(x, w, pad):
        return jax.lax.conv_general_dilated(
            x, w, (1, 1), [(pad, pad), (pad, pad)],
            dimension_numbers=("NCHW", "OIHW", "NCHW"))

    def bn(x, g, b, m, v):
        s = g / jnp.sqrt(v + EPS)
        return x * s[None, :, None, None] + (b - m * s)[None, :, None, None]

    out = jax.nn.relu(bn(conv(xu, params["w1"], 2), *params["bn1"]))
    out = bn(conv(out, params["w2"], 1), *params["bn2"])
    sc = bn(conv(xu, params["w_sc"], 2), *params["bn_sc"])
    return jax.nn.relu(out + sc)


# ----------------------------------------------------------------------------
# Main
# ----------------------------------------------------------------------------
if __name__ == "__main__":
    key = jax.random.PRNGKey(0)
    N, Cin, Cout = 2, 4, 8
    Hin, Win = 8, 8
    oheight, owidth = 2 * Hin, 2 * Win          # 16 x 16 after up-pooling

    ks = jax.random.split(key, 12)
    params = {
        # conv weights in PyTorch OIHW layout
        "w1":   0.1 * jax.random.normal(ks[0], (Cout, Cin, 5, 5), jnp.float32),
        "w2":   0.1 * jax.random.normal(ks[1], (Cout, Cout, 3, 3), jnp.float32),
        "w_sc": 0.1 * jax.random.normal(ks[2], (Cout, Cin, 5, 5), jnp.float32),
        # BN params: (gamma, beta, running_mean, running_var)
        "bn1": (1.0 + 0.1 * jax.random.normal(ks[3], (Cout,), jnp.float32),
                0.1 * jax.random.normal(ks[4], (Cout,), jnp.float32),
                0.1 * jax.random.normal(ks[5], (Cout,), jnp.float32),
                1.0 + 0.1 * jnp.abs(jax.random.normal(ks[6], (Cout,), jnp.float32))),
        "bn2": (1.0 + 0.1 * jax.random.normal(ks[7], (Cout,), jnp.float32),
                0.1 * jax.random.normal(ks[8], (Cout,), jnp.float32),
                0.1 * jax.random.normal(ks[9], (Cout,), jnp.float32),
                1.0 + 0.1 * jnp.abs(jax.random.normal(ks[10], (Cout,), jnp.float32))),
        "bn_sc": (jnp.ones((Cout,), jnp.float32),
                  jnp.zeros((Cout,), jnp.float32),
                  jnp.zeros((Cout,), jnp.float32),
                  jnp.ones((Cout,), jnp.float32)),
    }

    x = jax.random.normal(ks[11], (N, Cin, Hin, Win), jnp.float32)

    # Weight prep runs ONCE (outside the per-forward jit).
    prep = jax.tree_util.tree_map(jax.block_until_ready,
                                  prepare_gudi_upproj_params(params, owidth))

    fwd = jax.jit(functools.partial(gudi_upproj_block_forward,
                                    oheight=oheight, owidth=owidth))
    out = jax.block_until_ready(fwd(x, prep))

    ref = jax.block_until_ready(reference_forward(x, params, oheight, owidth))
    assert out.shape == (N, Cout, oheight, owidth), out.shape
    # bf16 MXU inputs with f32 accumulation vs. full-f32 reference -> relaxed tol.
    assert jnp.allclose(out, ref, atol=4e-2, rtol=4e-2), (
        float(jnp.max(jnp.abs(out - ref))))

    print("KERNEL_OK")
</pallas_src>

<mosaic_0001>
module attributes {stable_mosaic.version = 11 : i64} {
  func.func @_fused_kernel(%arg0: i32, %arg1: memref<1x16x320xbf16, #tpu.memory_space<vmem>>, %arg2: memref<320x256xbf16, #tpu.memory_space<vmem>>, %arg3: memref<1x256xf32, #tpu.memory_space<vmem>>, %arg4: memref<384x128xbf16, #tpu.memory_space<vmem>>, %arg5: memref<1x128xf32, #tpu.memory_space<vmem>>, %arg6: memref<1x16x128xf32, #tpu.memory_space<vmem>>) attributes {dimension_semantics = [#tpu.dimension_semantics<parallel>], iteration_bounds = array<i64: 2>, scalar_prefetch = 0 : i64, scratch_operands = 0 : i64, tpu.core_type = #tpu.core_type<tc>, window_params = [{transform_indices = @transform_0, window_bounds = array<i64: 1, 16, 320>}, {pipeline_mode = #tpu.pipeline_mode<synchronous>, transform_indices = @transform_1, window_bounds = array<i64: 320, 256>}, {pipeline_mode = #tpu.pipeline_mode<synchronous>, transform_indices = @transform_2, window_bounds = array<i64: 1, 256>}, {pipeline_mode = #tpu.pipeline_mode<synchronous>, transform_indices = @transform_3, window_bounds = array<i64: 384, 128>}, {pipeline_mode = #tpu.pipeline_mode<synchronous>, transform_indices = @transform_4, window_bounds = array<i64: 1, 128>}, {transform_indices = @transform_5, window_bounds = array<i64: 1, 16, 128>}]} {
    %c0 = arith.constant 0 : index
    %c0_0 = arith.constant 0 : index
    %c0_1 = arith.constant 0 : index
    %0 = vector.load %arg1[%c0, %c0_0, %c0_1] : memref<1x16x320xbf16, #tpu.memory_space<vmem>>, vector<1x16x320xbf16>
    %1 = vector.shape_cast %0 : vector<1x16x320xbf16> to vector<16x320xbf16>
    %c0_2 = arith.constant 0 : index
    %c0_3 = arith.constant 0 : index
    %2 = vector.load %arg2[%c0_2, %c0_3] : memref<320x256xbf16, #tpu.memory_space<vmem>>, vector<320x256xbf16>
    %cst = arith.constant dense<0.000000e+00> : vector<16x256xf32>
    %3 = tpu.matmul %1, %2, %cst {dimension_numbers = #tpu.dot_dimension_numbers<[1], [0], [0], [1], [0, 0, 1, 1], [], []>} : vector<16x320xbf16>, vector<320x256xbf16>, vector<16x256xf32> -> vector<16x256xf32>
    %c0_4 = arith.constant 0 : index
    %c0_5 = arith.constant 0 : index
    %4 = vector.load %arg3[%c0_4, %c0_5] : memref<1x256xf32, #tpu.memory_space<vmem>>, vector<1x256xf32>
    %5 = vector.broadcast %4 : vector<1x256xf32> to vector<16x256xf32>
    %6 = arith.addf %3, %5 : vector<16x256xf32>
    %7 = vector.extract_strided_slice %6 {offsets = [0, 0], sizes = [16, 128], strides = [1, 1]} : vector<16x256xf32> to vector<16x128xf32>
    %cst_6 = arith.constant 0.000000e+00 : f32
    %8 = vector.broadcast %cst_6 : f32 to vector<16x128xf32>
    %9 = arith.maximumf %7, %8 : vector<16x128xf32>
    %10 = vector.extract_strided_slice %6 {offsets = [0, 128], sizes = [16, 128], strides = [1, 1]} : vector<16x256xf32> to vector<16x128xf32>
    %cst_7 = arith.constant 0.000000e+00 : f32
    %11 = vector.broadcast %cst_7 : f32 to vector<1x128xf32>
    %12 = vector.extract_strided_slice %9 {offsets = [0, 0], sizes = [15, 128], strides = [1, 1]} : vector<16x128xf32> to vector<15x128xf32>
    %13 = tpu.concatenate %11, %12 in 0 : vector<1x128xf32>, vector<15x128xf32> -> vector<16x128xf32>
    %14 = vector.extract_strided_slice %9 {offsets = [1, 0], sizes = [15, 128], strides = [1, 1]} : vector<16x128xf32> to vector<15x128xf32>
    %cst_8 = arith.constant 0.000000e+00 : f32
    %15 = vector.broadcast %cst_8 : f32 to vector<1x128xf32>
    %16 = tpu.concatenate %14, %15 in 0 : vector<15x128xf32>, vector<1x128xf32> -> vector<16x128xf32>
    %17 = tpu.concatenate %13, %9, %16 in 1 : vector<16x128xf32>, vector<16x128xf32>, vector<16x128xf32> -> vector<16x384xf32>
    %18 = arith.truncf %17 : vector<16x384xf32> to vector<16x384xbf16>
    %c0_9 = arith.constant 0 : index
    %c0_10 = arith.constant 0 : index
    %19 = vector.load %arg4[%c0_9, %c0_10] : memref<384x128xbf16, #tpu.memory_space<vmem>>, vector<384x128xbf16>
    %cst_11 = arith.constant dense<0.000000e+00> : vector<16x128xf32>
    %20 = tpu.matmul %18, %19, %cst_11 {dimension_numbers = #tpu.dot_dimension_numbers<[1], [0], [0], [1], [0, 0, 1, 1], [], []>} : vector<16x384xbf16>, vector<384x128xbf16>, vector<16x128xf32> -> vector<16x128xf32>
    %c0_12 = arith.constant 0 : index
    %c0_13 = arith.constant 0 : index
    %21 = vector.load %arg5[%c0_12, %c0_13] : memref<1x128xf32, #tpu.memory_space<vmem>>, vector<1x128xf32>
    %22 = vector.broadcast %21 : vector<1x128xf32> to vector<16x128xf32>
    %23 = arith.addf %20, %22 : vector<16x128xf32>
    %24 = arith.addf %23, %10 : vector<16x128xf32>
    %cst_14 = arith.constant 0.000000e+00 : f32
    %25 = vector.broadcast %cst_14 : f32 to vector<16x128xf32>
    %26 = arith.maximumf %24, %25 : vector<16x128xf32>
    %c0_15 = arith.constant 0 : index
    %c0_16 = arith.constant 0 : index
    %c0_17 = arith.constant 0 : index
    %27 = vector.load %arg6[%c0_15, %c0_16, %c0_17] : memref<1x16x128xf32, #tpu.memory_space<vmem>>, vector<1x16x128xf32>
    %28 = vector.shape_cast %27 : vector<1x16x128xf32> to vector<16x128xf32>
    %29 = vector.shape_cast %26 : vector<16x128xf32> to vector<1x16x128xf32>
    tpu.vector_store %arg6[%c0_15, %c0_16, %c0_17], %29 {strides = array<i32>} : memref<1x16x128xf32, #tpu.memory_space<vmem>>, vector<1x16x128xf32>,
    return
  }
  func.func @transform_0(%arg0: i32) -> (i32, i32, i32) {
    %c0_i32 = arith.constant 0 : i32
    %c0_i32_0 = arith.constant 0 : i32
    %c0_i32_1 = arith.constant 0 : i32
    return %arg0, %c0_i32, %c0_i32_0 : i32, i32, i32
  }
  func.func @transform_1(%arg0: i32) -> (i32, i32) {
    %c0_i32 = arith.constant 0 : i32
    %c0_i32_0 = arith.constant 0 : i32
    %c0_i32_1 = arith.constant 0 : i32
    return %c0_i32, %c0_i32_0 : i32, i32
  }
  func.func @transform_2(%arg0: i32) -> (i32, i32) {
    %c0_i32 = arith.constant 0 : i32
    %c0_i32_0 = arith.constant 0 : i32
    %c0_i32_1 = arith.constant 0 : i32
    return %c0_i32, %c0_i32_0 : i32, i32
  }
  func.func @transform_3(%arg0: i32) -> (i32, i32) {
    %c0_i32 = arith.constant 0 : i32
    %c0_i32_0 = arith.constant 0 : i32
    %c0_i32_1 = arith.constant 0 : i32
    return %c0_i32, %c0_i32_0 : i32, i32
  }
  func.func @transform_4(%arg0: i32) -> (i32, i32) {
    %c0_i32 = arith.constant 0 : i32
    %c0_i32_0 = arith.constant 0 : i32
    %c0_i32_1 = arith.constant 0 : i32
    return %c0_i32, %c0_i32_0 : i32, i32
  }
  func.func @transform_5(%arg0: i32) -> (i32, i32, i32) {
    %c0_i32 = arith.constant 0 : i32
    %c0_i32_0 = arith.constant 0 : i32
    %c0_i32_1 = arith.constant 0 : i32
    return %arg0, %c0_i32, %c0_i32_0 : i32, i32, i32
  }
}

</mosaic_0001>

<llo_original>
// kernel: gudi_upproj_block_forward.1
$region0: #{gudi_upproj_block_forward.1}
  #allocation0 [shape = 'u32[]', space=smem, size = 0x4, offset = 0x4, fixed_abs, tag = 'smem constant byte address 0x4 - core index']
  #allocation1 [shape = 'u32[144,128]{1,0:T(1,128)}', space=vmem, size = 0x12000, scoped, tag = 'internal scratch']
  %s0 = inlined_call_operand.vmem [shape: bf16[2,16,320], index: 0, kind: input, shape index: {}]
  %s1 = inlined_call_operand.vmem [shape: bf16[320,256], index: 1, kind: input, shape index: {}]
  %s2 = inlined_call_operand.vmem [shape: f32[1,256], index: 2, kind: input, shape index: {}]
  %s3 = inlined_call_operand.vmem [shape: bf16[384,128], index: 3, kind: input, shape index: {}]
  %s4 = inlined_call_operand.vmem [shape: f32[1,128], index: 4, kind: input, shape index: {}]
  %s5 = inlined_call_operand.vmem [shape: f32[2,16,128], index: 5, kind: output, shape index: {}]
  %s6 = sld [smem:[#allocation0]]
  $region53: #{gudi_upproj_block_forward.1} parent=0
    _
  %s8 = ssub.s32 1, %s6
  %s9 = scalar_select 0, %s8, %s6
  loop: start=0, step=1, limit=4
  $region2: #{gudi_upproj_block_forward.1} parent=0 // loop_pre_header
    _
  $region3: #{gudi_upproj_block_forward.1} parent=0 // loop_header
    %s11 = sphi 0, %s15
    %p12 = scmp.ge.s32.totalorder %s11, 4
    %s21 = sphi 0, %s23
    %s24 = sphi 0, %s21
    %s25 = sphi 0, %s24
    %s41 = sphi 0, %s25
    %s45 = sphi 0, %s45
    %s47 = sphi 0, %s45
    %s48 = sphi 0, %s47
    %s62 = sphi 0, %s48
    %s66 = sphi 0, %s66
    %s68 = sphi 0, %s66
    %s69 = sphi 0, %s68
    %s83 = sphi 0, %s69
    %s87 = sphi 0, %s87
    %s89 = sphi 0, %s87
    %s90 = sphi 0, %s89
    %s104 = sphi 0, %s90
    %s108 = sphi 0, %s108
    %s110 = sphi 0, %s108
    %s111 = sphi 0, %s110
    %s125 = sphi 0, %s111
    %s131 = sphi 0, %s133
    %s134 = sphi 0, %s131
    %s135 = sphi 0, %s134
    %s151 = sphi 0, %s135
  $region4: #{gudi_upproj_block_forward.1} parent=0 // loop_header_branch
    %14 = sbr.rel (%p12) target = $region8
  $region5: #{gudi_upproj_block_forward.1} parent=0 // loop_body
    %s16 = ssub.s32 %s11, 1
    %s17 = ssub.s32 %s11, 2
    %s18 = sadd.s32 %s11, 1
    %s19 = ssub.s32 %s11, %s18
    %p20 = scmp.eq.s32.totalorder %s19, 0
    %s22 = sadd.s32 %s21, 1
    %s23 = scalar_select %p20, %s21, %s22
    %p26 = pneg %p20
    %p27 = scmp.eq.s32.totalorder %s11, 1
    %p28 = por %p26, %p27
    %p29 = scmp.ne.s32.totalorder %s21, %s24
    %p30 = scmp.eq.s32.totalorder %s11, 0
    %p31 = por %p29, %p30
    %p32 = scmp.ne.s32.totalorder %s21, %s24
    %p33 = scmp.eq.s32.totalorder %s16, 1
    %p34 = por %p32, %p33
    %p35 = scmp.ne.s32.totalorder %s24, %s25
    %p36 = scmp.eq.s32.totalorder %s16, 0
    %p37 = por %p35, %p36
    %p38 = scmp.ne.s32.totalorder %s24, %s25
    %p39 = scmp.eq.s32.totalorder %s17, 1
    %p40 = por %p38, %p39
    %p42 = scmp.ne.s32.totalorder %s25, %s41
    %p43 = scmp.eq.s32.totalorder %s17, 0
    %p44 = por %p42, %p43
    %s46 = sadd.s32 %s45, 1
    %p49 = scmp.eq.s32.totalorder %s11, 1
    %p50 = scmp.ne.s32.totalorder %s45, %s47
    %p51 = scmp.eq.s32.totalorder %s11, 0
    %p52 = por %p50, %p51
    %p53 = scmp.ne.s32.totalorder %s45, %s47
    %p54 = scmp.eq.s32.totalorder %s16, 1
    %p55 = por %p53, %p54
    %p56 = scmp.ne.s32.totalorder %s47, %s48
    %p57 = scmp.eq.s32.totalorder %s16, 0
    %p58 = por %p56, %p57
    %p59 = scmp.ne.s32.totalorder %s47, %s48
    %p60 = scmp.eq.s32.totalorder %s17, 1
    %p61 = por %p59, %p60
    %p63 = scmp.ne.s32.totalorder %s48, %s62
    %p64 = scmp.eq.s32.totalorder %s17, 0
    %p65 = por %p63, %p64
    %s67 = sadd.s32 %s66, 1
    %p70 = scmp.eq.s32.totalorder %s11, 1
    %p71 = scmp.ne.s32.totalorder %s66, %s68
    %p72 = scmp.eq.s32.totalorder %s11, 0
    %p73 = por %p71, %p72
    %p74 = scmp.ne.s32.totalorder %s66, %s68
    %p75 = scmp.eq.s32.totalorder %s16, 1
    %p76 = por %p74, %p75
    %p77 = scmp.ne.s32.totalorder %s68, %s69
    %p78 = scmp.eq.s32.totalorder %s16, 0
    %p79 = por %p77, %p78
    %p80 = scmp.ne.s32.totalorder %s68, %s69
    %p81 = scmp.eq.s32.totalorder %s17, 1
    %p82 = por %p80, %p81
    %p84 = scmp.ne.s32.totalorder %s69, %s83
    %p85 = scmp.eq.s32.totalorder %s17, 0
    %p86 = por %p84, %p85
    %s88 = sadd.s32 %s87, 1
    %p91 = scmp.eq.s32.totalorder %s11, 1
    %p92 = scmp.ne.s32.totalorder %s87, %s89
    %p93 = scmp.eq.s32.totalorder %s11, 0
    %p94 = por %p92, %p93
    %p95 = scmp.ne.s32.totalorder %s87, %s89
    %p96 = scmp.eq.s32.totalorder %s16, 1
    %p97 = por %p95, %p96
    %p98 = scmp.ne.s32.totalorder %s89, %s90
    %p99 = scmp.eq.s32.totalorder %s16, 0
    %p100 = por %p98, %p99
    %p101 = scmp.ne.s32.totalorder %s89, %s90
    %p102 = scmp.eq.s32.totalorder %s17, 1
    %p103 = por %p101, %p102
    %p105 = scmp.ne.s32.totalorder %s90, %s104
    %p106 = scmp.eq.s32.totalorder %s17, 0
    %p107 = por %p105, %p106
    %s109 = sadd.s32 %s108, 1
    %p112 = scmp.eq.s32.totalorder %s11, 1
    %p113 = scmp.ne.s32.totalorder %s108, %s110
    %p114 = scmp.eq.s32.totalorder %s11, 0
    %p115 = por %p113, %p114
    %p116 = scmp.ne.s32.totalorder %s108, %s110
    %p117 = scmp.eq.s32.totalorder %s16, 1
    %p118 = por %p116, %p117
    %p119 = scmp.ne.s32.totalorder %s110, %s111
    %p120 = scmp.eq.s32.totalorder %s16, 0
    %p121 = por %p119, %p120
    %p122 = scmp.ne.s32.totalorder %s110, %s111
    %p123 = scmp.eq.s32.totalorder %s17, 1
    %p124 = por %p122, %p123
    %p126 = scmp.ne.s32.totalorder %s111, %s125
    %p127 = scmp.eq.s32.totalorder %s17, 0
    %p128 = por %p126, %p127
    %s129 = ssub.s32 %s11, %s18
    %p130 = scmp.eq.s32.totalorder %s129, 0
    %s132 = sadd.s32 %s131, 1
    %s133 = scalar_select %p130, %s131, %s132
    %p136 = pneg %p130
    %p137 = scmp.eq.s32.totalorder %s11, 1
    %p138 = por %p136, %p137
    %p139 = scmp.ne.s32.totalorder %s131, %s134
    %p140 = scmp.eq.s32.totalorder %s11, 0
    %p141 = por %p139, %p140
    %p142 = scmp.ne.s32.totalorder %s131, %s134
    %p143 = scmp.eq.s32.totalorder %s16, 1
    %p144 = por %p142, %p143
    %p145 = scmp.ne.s32.totalorder %s134, %s135
    %p146 = scmp.eq.s32.totalorder %s16, 0
    %p147 = por %p145, %p146
    %p148 = scmp.ne.s32.totalorder %s134, %s135
    %p149 = scmp.eq.s32.totalorder %s17, 1
    %p150 = por %p148, %p149
    %p152 = scmp.ne.s32.totalorder %s135, %s151
    %p153 = scmp.eq.s32.totalorder %s17, 0
    %p154 = por %p152, %p153
    %p155 = scmp.le.s32.totalorder 1, %s11
    %p156 = scmp.lt.s32.totalorder %s11, 3
    %p157 = pnand %p155, %p156
    %p158 = pneg %p157
    // Predicated region
    $region9: #{gudi_upproj_block_forward.1} parent=5 // pred_check
      _
    $region10: #{gudi_upproj_block_forward.1} parent=5 // pred_check_branch
      %160 = sbr.rel (%p157) target = $region12
    $region11: #{gudi_upproj_block_forward.1} parent=5 // pred_region
      %s161 = ssub.s32 %s11, 1
      // Predicated region
      $region13: #{gudi_upproj_block_forward.1} parent=11 // pred_check
        %p162 = pneg %p58
      $region14: #{gudi_upproj_block_forward.1} parent=11 // pred_check_branch
        %164 = sbr.rel (%p162) target = $region16
      $region15: #{gudi_upproj_block_forward.1} parent=11 // pred_region
        _
      $region16: #{gudi_upproj_block_forward.1} parent=11 // pred_fallthru
        _
      // Predicated region
      $region17: #{gudi_upproj_block_forward.1} parent=11 // pred_check
        %p165 = pneg %p79
      $region18: #{gudi_upproj_block_forward.1} parent=11 // pred_check_branch
        %167 = sbr.rel (%p165) target = $region20
      $region19: #{gudi_upproj_block_forward.1} parent=11 // pred_region
        _
      $region20: #{gudi_upproj_block_forward.1} parent=11 // pred_fallthru
        _
      // Predicated region
      $region21: #{gudi_upproj_block_forward.1} parent=11 // pred_check
        %p168 = pneg %p100
      $region22: #{gudi_upproj_block_forward.1} parent=11 // pred_check_branch
        %170 = sbr.rel (%p168) target = $region24
      $region23: #{gudi_upproj_block_forward.1} parent=11 // pred_region
        _
      $region24: #{gudi_upproj_block_forward.1} parent=11 // pred_fallthru
        _
      // Predicated region
      $region25: #{gudi_upproj_block_forward.1} parent=11 // pred_check
        %p171 = pneg %p121
      $region26: #{gudi_upproj_block_forward.1} parent=11 // pred_check_branch
        %173 = sbr.rel (%p171) target = $region28
      $region27: #{gudi_upproj_block_forward.1} parent=11 // pred_region
        _
      $region28: #{gudi_upproj_block_forward.1} parent=11 // pred_fallthru
        _
    $region12: #{gudi_upproj_block_forward.1} parent=5 // pred_fallthru
      _
    %p174 = scmp.lt.s32.totalorder %s11, 2
    // Predicated region
    $region29: #{gudi_upproj_block_forward.1} parent=5 // pred_check
      %p175 = pneg %p174
    $region30: #{gudi_upproj_block_forward.1} parent=5 // pred_check_branch
      %177 = sbr.rel (%p175) target = $region32
    $region31: #{gudi_upproj_block_forward.1} parent=5 // pred_region
      // Predicated region
      $region33: #{gudi_upproj_block_forward.1} parent=31 // pred_check
        %p178 = pneg %p31
      $region34: #{gudi_upproj_block_forward.1} parent=31 // pred_check_branch
        %180 = sbr.rel (%p178) target = $region36
      $region35: #{gudi_upproj_block_forward.1} parent=31 // pred_region
        %p181 = scmp.lt.s32.totalorder %s11, 1
        %s182 = scalar_select %p181, %s11, 1
        %s183 = smul.addr %s182, 6
        %s184 = smul.addr %s183, 4
        %s185 = scalar_lea.vmem %s0, %s184
      $region36: #{gudi_upproj_block_forward.1} parent=31 // pred_fallthru
        _
    $region32: #{gudi_upproj_block_forward.1} parent=5 // pred_fallthru
      _
    %p186 = scmp.le.s32.totalorder 1, %s11
    %p187 = scmp.lt.s32.totalorder %s11, 3
    %p188 = pnand %p186, %p187
    %p189 = pneg %p188
    // Predicated region
    $region37: #{gudi_upproj_block_forward.1} parent=5 // pred_check
      _
    $region38: #{gudi_upproj_block_forward.1} parent=5 // pred_check_branch
      %191 = sbr.rel (%p188) target = $region40
    $region39: #{gudi_upproj_block_forward.1} parent=5 // pred_region
      %s192 = ssub.s32 %s11, 1
      %p193 = scmp.lt.s32.totalorder %s16, 1
      %s194 = scalar_select %p193, %s16, 1
      %s195 = smul.addr %s194, 6
      %s196 = smul.addr %s195, 4
      %s197 = scalar_lea.vmem %s0, %s196
      %p198 = pneg %p37
      %p199 = pneg %p34
      %p200 = pneg %p58
      %p201 = pneg %p55
      %p202 = pneg %p79
      %p203 = pneg %p76
      %p204 = pneg %p100
      %p205 = pneg %p97
      %p206 = pneg %p121
      %p207 = pneg %p118
      %p208 = pneg %p147
      %p209 = pneg %p144
      %p210 = scmp.lt.s32.totalorder %s16, 1
      %s211 = scalar_select %p210, %s16, 1
      %s212 = smul.addr %s211, 2
      %s213 = smul.addr %s212, 8
      %s214 = scalar_lea.vmem %s5, %s213
      %p215 = scmp.lt.s32.totalorder %s16, 1
      %s216 = scalar_select %p215, %s16, 1
      %s217 = smul.addr %s216, 6
      %s218 = smul.addr %s217, 4
      %s219 = scalar_lea.vmem %s0, %s218
      %p220 = scmp.lt.s32.totalorder %s16, 1
      %s221 = scalar_select %p220, %s16, 1
      %s222 = smul.addr %s221, 2
      %s223 = smul.addr %s222, 8
      %s224 = scalar_lea.vmem %s5, %s223
      %v226 = vld [vmem:[%s219] sm:$0xff]
      %v227 = vld [vmem:[%s219 + $0x8] sm:$0xf]
      %v228 = vld [vmem:[%s219 + $0xc] sm:$0xff]
      %v229 = vld [vmem:[%s219 + $0x14] sm:$0xf]
      %v230 = vld [vmem:[%s1] sm:$0xff]
      %v231 = vld [vmem:[%s1 + $0x8] sm:$0xff]
      %v232 = vld [vmem:[%s1 + $0x10] sm:$0xff]
      %v233 = vld [vmem:[%s1 + $0x18] sm:$0xff]
      %v234 = vld [vmem:[%s1 + $0x20] sm:$0xff]
      %v235 = vld [vmem:[%s1 + $0x28] sm:$0xff]
      %v236 = vld [vmem:[%s1 + $0x30] sm:$0xff]
      %v237 = vld [vmem:[%s1 + $0x38] sm:$0xff]
      %v238 = vld [vmem:[%s1 + $0x40] sm:$0xff]
      %v239 = vld [vmem:[%s1 + $0x48] sm:$0xff]
      %v240 = vld [vmem:[%s1 + $0x50] sm:$0xff]
      %v241 = vld [vmem:[%s1 + $0x58] sm:$0xff]
      %v242 = vld [vmem:[%s1 + $0x60] sm:$0xff]
      %v243 = vld [vmem:[%s1 + $0x68] sm:$0xff]
      %v244 = vld [vmem:[%s1 + $0x70] sm:$0xff]
      %v245 = vld [vmem:[%s1 + $0x78] sm:$0xff]
      %v246 = vld [vmem:[%s1 + $0x80] sm:$0xff]
      %v247 = vld [vmem:[%s1 + $0x88] sm:$0xff]
      %v248 = vld [vmem:[%s1 + $0x90] sm:$0xff]
      %v249 = vld [vmem:[%s1 + $0x98] sm:$0xff]
      %v250 = vld [vmem:[%s1 + $0xa0] sm:$0xff]
      %v251 = vld [vmem:[%s1 + $0xa8] sm:$0xff]
      %v252 = vld [vmem:[%s1 + $0xb0] sm:$0xff]
      %v253 = vld [vmem:[%s1 + $0xb8] sm:$0xff]
      %v254 = vld [vmem:[%s1 + $0xc0] sm:$0xff]
      %v255 = vld [vmem:[%s1 + $0xc8] sm:$0xff]
      %v256 = vld [vmem:[%s1 + $0xd0] sm:$0xff]
      %v257 = vld [vmem:[%s1 + $0xd8] sm:$0xff]
      %v258 = vld [vmem:[%s1 + $0xe0] sm:$0xff]
      %v259 = vld [vmem:[%s1 + $0xe8] sm:$0xff]
      %v260 = vld [vmem:[%s1 + $0xf0] sm:$0xff]
      %v261 = vld [vmem:[%s1 + $0xf8] sm:$0xff]
      %v262 = vld [vmem:[%s1 + $0x100] sm:$0xff]
      %v263 = vld [vmem:[%s1 + $0x108] sm:$0xff]
      %v264 = vld [vmem:[%s1 + $0x110] sm:$0xff]
      %v265 = vld [vmem:[%s1 + $0x118] sm:$0xff]
      %v266 = vld [vmem:[%s1 + $0x120] sm:$0xff]
      %v267 = vld [vmem:[%s1 + $0x128] sm:$0xff]
      %v268 = vld [vmem:[%s1 + $0x130] sm:$0xff]
      %v269 = vld [vmem:[%s1 + $0x138] sm:$0xff]
      %v270 = vld [vmem:[%s2] sm:$0x3]
      %v272 = vlaneseq
      %v273 = vshrl.u32 %v272, 7
      %v274 = vsub.s32 0, %v273
      %v275 = vrot.slane %v270, %v274
      %v276 = vlaneseq
      %v277 = vshrl.u32 %v276, 7
      %v278 = vsub.s32 1, %v277
      %v279 = vrot.slane %v270, %v278
      %v286 = vunpack.c.l.b16 %v226
      %v287 = vunpack.c.h.b16 %v226
      %v288 = vunpack.c.l.b16 %v227
      %v289 = vunpack.c.l.b16 %v228
      %v290 = vunpack.c.h.b16 %v228
      %v291 = vunpack.c.l.b16 %v229
      %v292 = vpack.c.b16 %v289, %v286
      %v293 = vpack.c.b16 %v290, %v287
      %v294 = vpack.c.b16 %v291, %v288
      %v337 = vunpack.c.l.b16 %v230
      %v338 = vunpack.c.h.b16 %v230
      %v339 = vunpack.c.l.b16 %v231
      %v340 = vunpack.c.h.b16 %v231
      %v341 = vunpack.c.l.b16 %v232
      %v342 = vunpack.c.h.b16 %v232
      %v343 = vunpack.c.l.b16 %v233
      %v344 = vunpack.c.h.b16 %v233
      %v345 = vunpack.c.l.b16 %v234
      %v346 = vunpack.c.h.b16 %v234
      %v347 = vunpack.c.l.b16 %v235
      %v348 = vunpack.c.h.b16 %v235
      %v349 = vunpack.c.l.b16 %v236
      %v350 = vunpack.c.h.b16 %v236
      %v351 = vunpack.c.l.b16 %v237
      %v352 = vunpack.c.h.b16 %v237
      %v353 = vunpack.c.l.b16 %v238
      %v354 = vunpack.c.h.b16 %v238
      %v355 = vunpack.c.l.b16 %v239
      %v356 = vunpack.c.h.b16 %v239
      %v357 = vunpack.c.l.b16 %v240
      %v358 = vunpack.c.h.b16 %v240
      %v359 = vunpack.c.l.b16 %v241
      %v360 = vunpack.c.h.b16 %v241
      %v361 = vunpack.c.l.b16 %v242
      %v362 = vunpack.c.h.b16 %v242
      %v363 = vunpack.c.l.b16 %v243
      %v364 = vunpack.c.h.b16 %v243
      %v365 = vunpack.c.l.b16 %v244
      %v366 = vunpack.c.h.b16 %v244
      %v367 = vunpack.c.l.b16 %v245
      %v368 = vunpack.c.h.b16 %v245
      %v369 = vunpack.c.l.b16 %v246
      %v370 = vunpack.c.h.b16 %v246
      %v371 = vunpack.c.l.b16 %v247
      %v372 = vunpack.c.h.b16 %v247
      %v373 = vunpack.c.l.b16 %v248
      %v374 = vunpack.c.h.b16 %v248
      %v375 = vunpack.c.l.b16 %v249
      %v376 = vunpack.c.h.b16 %v249
      %v377 = vunpack.c.l.b16 %v250
      %v378 = vunpack.c.h.b16 %v250
      %v379 = vunpack.c.l.b16 %v251
      %v380 = vunpack.c.h.b16 %v251
      %v381 = vunpack.c.l.b16 %v252
      %v382 = vunpack.c.h.b16 %v252
      %v383 = vunpack.c.l.b16 %v253
      %v384 = vunpack.c.h.b16 %v253
      %v385 = vunpack.c.l.b16 %v254
      %v386 = vunpack.c.h.b16 %v254
      %v387 = vunpack.c.l.b16 %v255
      %v388 = vunpack.c.h.b16 %v255
      %v389 = vunpack.c.l.b16 %v256
      %v390 = vunpack.c.h.b16 %v256
      %v391 = vunpack.c.l.b16 %v257
      %v392 = vunpack.c.h.b16 %v257
      %v393 = vunpack.c.l.b16 %v258
      %v394 = vunpack.c.h.b16 %v258
      %v395 = vunpack.c.l.b16 %v259
      %v396 = vunpack.c.h.b16 %v259
      %v397 = vunpack.c.l.b16 %v260
      %v398 = vunpack.c.h.b16 %v260
      %v399 = vunpack.c.l.b16 %v261
      %v400 = vunpack.c.h.b16 %v261
      %v401 = vunpack.c.l.b16 %v262
      %v402 = vunpack.c.h.b16 %v262
      %v403 = vunpack.c.l.b16 %v263
      %v404 = vunpack.c.h.b16 %v263
      %v405 = vunpack.c.l.b16 %v264
      %v406 = vunpack.c.h.b16 %v264
      %v407 = vunpack.c.l.b16 %v265
      %v408 = vunpack.c.h.b16 %v265
      %v409 = vunpack.c.l.b16 %v266
      %v410 = vunpack.c.h.b16 %v266
      %v411 = vunpack.c.l.b16 %v267
      %v412 = vunpack.c.h.b16 %v267
      %v413 = vunpack.c.l.b16 %v268
      %v414 = vunpack.c.h.b16 %v268
      %v415 = vunpack.c.l.b16 %v269
      %v416 = vunpack.c.h.b16 %v269
      %v417 = vpack.c.b16 %v339, %v337
      %v418 = vpack.c.b16 %v340, %v338
      %v419 = vpack.c.b16 %v343, %v341
      %v420 = vpack.c.b16 %v344, %v342
      %v421 = vpack.c.b16 %v347, %v345
      %v422 = vpack.c.b16 %v348, %v346
      %v423 = vpack.c.b16 %v351, %v349
      %v424 = vpack.c.b16 %v352, %v350
      %v425 = vpack.c.b16 %v355, %v353
      %v426 = vpack.c.b16 %v356, %v354
      %v427 = vpack.c.b16 %v359, %v357
      %v428 = vpack.c.b16 %v360, %v358
      %v429 = vpack.c.b16 %v363, %v361
      %v430 = vpack.c.b16 %v364, %v362
      %v431 = vpack.c.b16 %v367, %v365
      %v432 = vpack.c.b16 %v368, %v366
      %v433 = vpack.c.b16 %v371, %v369
      %v434 = vpack.c.b16 %v372, %v370
      %v435 = vpack.c.b16 %v375, %v373
      %v436 = vpack.c.b16 %v376, %v374
      %v437 = vpack.c.b16 %v379, %v377
      %v438 = vpack.c.b16 %v380, %v378
      %v439 = vpack.c.b16 %v383, %v381
      %v440 = vpack.c.b16 %v384, %v382
      %v441 = vpack.c.b16 %v387, %v385
      %v442 = vpack.c.b16 %v388, %v386
      %v443 = vpack.c.b16 %v391, %v389
      %v444 = vpack.c.b16 %v392, %v390
      %v445 = vpack.c.b16 %v395, %v393
      %v446 = vpack.c.b16 %v396, %v394
      %v447 = vpack.c.b16 %v399, %v397
      %v448 = vpack.c.b16 %v400, %v398
      %v449 = vpack.c.b16 %v403, %v401
      %v450 = vpack.c.b16 %v404, %v402
      %v451 = vpack.c.b16 %v407, %v405
      %v452 = vpack.c.b16 %v408, %v406
      %v453 = vpack.c.b16 %v411, %v409
      %v454 = vpack.c.b16 %v412, %v410
      %v455 = vpack.c.b16 %v415, %v413
      %v456 = vpack.c.b16 %v416, %v414
      %vm497 = vcmask 523264
      %v499 = vsel %vm497, %v294, 0
      %501 = vmatprep.subr.bf16.mxu0 %v418
      %502 = vmatpush1.bf16.msra.mxu0 %v417
      %503 = vmatprep.subr.bf16.mxu0 %v420
      %504 = vmatpush1.bf16.msra.mxu0 %v419
      %505 = vmatprep.subr.bf16.mxu0 %v422
      %506 = vmatpush1.bf16.msra.mxu0 %v421
      %507 = vmatprep.subr.bf16.mxu0 %v424
      %508 = vmatpush1.bf16.msra.mxu0 %v423
      %509 = vmatprep.subr.bf16.mxu0 %v426
      %510 = vmatpush1.bf16.msra.mxu0 %v425
      %511 = vmatprep.subr.bf16.mxu0 %v428
      %512 = vmatpush1.bf16.msra.mxu0 %v427
      %513 = vmatprep.subr.bf16.mxu0 %v430
      %514 = vmatpush1.bf16.msra.mxu0 %v429
      %515 = vmatprep.subr.bf16.mxu0 %v432
      %516 = vmatpush1.bf16.msra.mxu0 %v431
      %517 = vmatprep.subr.bf16.mxu0 %v434
      %518 = vmatpush1.bf16.msra.mxu0 %v433
      %519 = vmatprep.subr.bf16.mxu0 %v436
      %520 = vmatpush1.bf16.msra.mxu0 %v435
      %521 = vmatprep.subr.bf16.mxu0 %v438
      %522 = vmatpush1.bf16.msra.mxu0 %v437
      %523 = vmatprep.subr.bf16.mxu0 %v440
      %524 = vmatpush1.bf16.msra.mxu0 %v439
      %525 = vmatprep.subr.bf16.mxu0 %v442
      %526 = vmatpush1.bf16.msra.mxu0 %v441
      %527 = vmatprep.subr.bf16.mxu0 %v444
      %528 = vmatpush1.bf16.msra.mxu0 %v443
      %529 = vmatprep.subr.bf16.mxu0 %v446
      %530 = vmatpush1.bf16.msra.mxu0 %v445
      %531 = vmatprep.subr.bf16.mxu0 %v448
      %532 = vmatpush1.bf16.msra.mxu0 %v447
      %533 = vmatprep.mubr.bf16.mxu0 %v293
      %534 = vmatmul.mubr.bf16.gmra.mrb[0].mxu0 %v292
      %v535 = vpop.f32.mrb[0].mxu0
      %v536 = vadd.f32 %v275, %v535
      %v537 = vpop.f32.mrb[0].mxu0
      %v538 = vadd.f32 %v279, %v537
      %v539 = vpop.f32.mrb[0].mxu0
      %v540 = vadd.f32 %v275, %v539
      %v541 = vpop.f32.mrb[0].mxu0
      %v542 = vadd.f32 %v279, %v541
      %543 = vdwg.mxu0
      %544 = vmatprep.subr.bf16.mxu0 %v450
      %545 = vmatpush1.bf16.msra.mxu0 %v449
      %546 = vmatprep.subr.bf16.mxu0 %v452
      %547 = vmatpush1.bf16.msra.mxu0 %v451
      %548 = vmatprep.subr.bf16.mxu0 %v454
      %549 = vmatpush1.bf16.msra.mxu0 %v453
      %550 = vmatprep.subr.bf16.mxu0 %v456
      %551 = vmatpush1.bf16.msra.mxu0 %v455
      %552 = vmatprep.subr.bf16.mxu0 0
      %553 = vmatpush1.bf16.msra.mxu0 0
      %554 = vmatprep.subr.bf16.mxu0 0
      %555 = vmatpush1.bf16.msra.mxu0 0
      %556 = vmatprep.subr.bf16.mxu0 0
      %557 = vmatpush1.bf16.msra.mxu0 0
      %558 = vmatprep.subr.bf16.mxu0 0
      %559 = vmatpush1.bf16.msra.mxu0 0
      %560 = vmatprep.subr.bf16.mxu0 0
      %561 = vmatpush1.bf16.msra.mxu0 0
      %562 = vmatprep.subr.bf16.mxu0 0
      %563 = vmatpush1.bf16.msra.mxu0 0
      %564 = vmatprep.subr.bf16.mxu0 0
      %565 = vmatpush1.bf16.msra.mxu0 0
      %566 = vmatprep.subr.bf16.mxu0 0
      %567 = vmatpush1.bf16.msra.mxu0 0
      %568 = vmatprep.subr.bf16.mxu0 0
      %569 = vmatpush1.bf16.msra.mxu0 0
      %570 = vmatprep.subr.bf16.mxu0 0
      %571 = vmatpush1.bf16.msra.mxu0 0
      %572 = vmatprep.subr.bf16.mxu0 0
      %573 = vmatpush1.bf16.msra.mxu0 0
      %574 = vmatprep.subr.bf16.mxu0 0
      %575 = vmatpush1.bf16.msra.mxu0 0
      %576 = vmatprep.mubr.bf16.mxu0 0
      %577 = vmatmul.mubr.bf16.gmra.mrb[0].mxu0 %v499
      %v578 = vpop.f32.mrb[0].mxu0
      %v579 = vadd.f32 %v536, %v578
      %v580 = vpop.f32.mrb[0].mxu0
      %v581 = vadd.f32 %v538, %v580
      %v582 = vpop.f32.mrb[0].mxu0
      %v583 = vadd.f32 %v540, %v582
      %v584 = vpop.f32.mrb[0].mxu0
      %v585 = vadd.f32 %v542, %v584
      %586 = vdwg.mxu0
      %v587 = vmax.f32 %v579, 0.0
      %v588 = vmax.f32 %v583, 0.0
      %vm591 = vcmask 1040384
      %v592 = vrot.slane %v587, 7
      %v593 = vrot.slane %v588, 7
      %v594 = vsel %vm591, %v592, %v593
      %v597 = vsel %vm591, 0.0, %v592
      %vm598 = vcmask 1046528
      %v599 = vrot.slane %v587, 1
      %v600 = vrot.slane %v588, 1
      %v601 = vsel %vm598, %v599, %v600
      %v604 = vsel %vm598, %v600, 0.0
      %v605 = vpack.c.bf16 %v594, %v597
      %v606 = vpack.c.bf16 %v588, %v587
      %v607 = vpack.c.bf16 %v604, %v601
      %v608 = vld [vmem:[%s3] sm:$0xf]
      %v609 = vld [vmem:[%s3 + $0x4] sm:$0xf]
      %v610 = vld [vmem:[%s3 + $0x8] sm:$0xf]
      %v611 = vld [vmem:[%s3 + $0xc] sm:$0xf]
      %v612 = vld [vmem:[%s3 + $0x10] sm:$0xf]
      %v613 = vld [vmem:[%s3 + $0x14] sm:$0xf]
      %v614 = vld [vmem:[%s3 + $0x18] sm:$0xf]
      %v615 = vld [vmem:[%s3 + $0x1c] sm:$0xf]
      %v616 = vld [vmem:[%s3 + $0x20] sm:$0xf]
      %v617 = vld [vmem:[%s3 + $0x24] sm:$0xf]
      %v618 = vld [vmem:[%s3 + $0x28] sm:$0xf]
      %v619 = vld [vmem:[%s3 + $0x2c] sm:$0xf]
      %v620 = vld [vmem:[%s3 + $0x30] sm:$0xf]
      %v621 = vld [vmem:[%s3 + $0x34] sm:$0xf]
      %v622 = vld [vmem:[%s3 + $0x38] sm:$0xf]
      %v623 = vld [vmem:[%s3 + $0x3c] sm:$0xf]
      %v624 = vld [vmem:[%s3 + $0x40] sm:$0xf]
      %v625 = vld [vmem:[%s3 + $0x44] sm:$0xf]
      %v626 = vld [vmem:[%s3 + $0x48] sm:$0xf]
      %v627 = vld [vmem:[%s3 + $0x4c] sm:$0xf]
      %v628 = vld [vmem:[%s3 + $0x50] sm:$0xf]
      %v629 = vld [vmem:[%s3 + $0x54] sm:$0xf]
      %v630 = vld [vmem:[%s3 + $0x58] sm:$0xf]
      %v631 = vld [vmem:[%s3 + $0x5c] sm:$0xf]
      %v632 = vld [vmem:[%s3 + $0x60] sm:$0xf]
      %v633 = vld [vmem:[%s3 + $0x64] sm:$0xf]
      %v634 = vld [vmem:[%s3 + $0x68] sm:$0xf]
      %v635 = vld [vmem:[%s3 + $0x6c] sm:$0xf]
      %v636 = vld [vmem:[%s3 + $0x70] sm:$0xf]
      %v637 = vld [vmem:[%s3 + $0x74] sm:$0xf]
      %v638 = vld [vmem:[%s3 + $0x78] sm:$0xf]
      %v639 = vld [vmem:[%s3 + $0x7c] sm:$0xf]
      %v640 = vld [vmem:[%s3 + $0x80] sm:$0xf]
      %v641 = vld [vmem:[%s3 + $0x84] sm:$0xf]
      %v642 = vld [vmem:[%s3 + $0x88] sm:$0xf]
      %v643 = vld [vmem:[%s3 + $0x8c] sm:$0xf]
      %v644 = vld [vmem:[%s3 + $0x90] sm:$0xf]
      %v645 = vld [vmem:[%s3 + $0x94] sm:$0xf]
      %v646 = vld [vmem:[%s3 + $0x98] sm:$0xf]
      %v647 = vld [vmem:[%s3 + $0x9c] sm:$0xf]
      %v648 = vld [vmem:[%s3 + $0xa0] sm:$0xf]
      %v649 = vld [vmem:[%s3 + $0xa4] sm:$0xf]
      %v650 = vld [vmem:[%s3 + $0xa8] sm:$0xf]
      %v651 = vld [vmem:[%s3 + $0xac] sm:$0xf]
      %v652 = vld [vmem:[%s3 + $0xb0] sm:$0xf]
      %v653 = vld [vmem:[%s3 + $0xb4] sm:$0xf]
      %v654 = vld [vmem:[%s3 + $0xb8] sm:$0xf]
      %v655 = vld [vmem:[%s3 + $0xbc] sm:$0xf]
      %v656 = vld [vmem:[%s4] sm:$0x1]
      %v658 = vlaneseq
      %v659 = vshrl.u32 %v658, 7
      %v660 = vsub.s32 0, %v659
      %v661 = vrot.slane %v656, %v660
      %v711 = vunpack.c.l.b16 %v608
      %v712 = vunpack.c.l.b16 %v609
      %v713 = vunpack.c.l.b16 %v610
      %v714 = vunpack.c.l.b16 %v611
      %v715 = vunpack.c.l.b16 %v612
      %v716 = vunpack.c.l.b16 %v613
      %v717 = vunpack.c.l.b16 %v614
      %v718 = vunpack.c.l.b16 %v615
      %v719 = vunpack.c.l.b16 %v616
      %v720 = vunpack.c.l.b16 %v617
      %v721 = vunpack.c.l.b16 %v618
      %v722 = vunpack.c.l.b16 %v619
      %v723 = vunpack.c.l.b16 %v620
      %v724 = vunpack.c.l.b16 %v621
      %v725 = vunpack.c.l.b16 %v622
      %v726 = vunpack.c.l.b16 %v623
      %v727 = vunpack.c.l.b16 %v624
      %v728 = vunpack.c.l.b16 %v625
      %v729 = vunpack.c.l.b16 %v626
      %v730 = vunpack.c.l.b16 %v627
      %v731 = vunpack.c.l.b16 %v628
      %v732 = vunpack.c.l.b16 %v629
      %v733 = vunpack.c.l.b16 %v630
      %v734 = vunpack.c.l.b16 %v631
      %v735 = vunpack.c.l.b16 %v632
      %v736 = vunpack.c.l.b16 %v633
      %v737 = vunpack.c.l.b16 %v634
      %v738 = vunpack.c.l.b16 %v635
      %v739 = vunpack.c.l.b16 %v636
      %v740 = vunpack.c.l.b16 %v637
      %v741 = vunpack.c.l.b16 %v638
      %v742 = vunpack.c.l.b16 %v639
      %v743 = vunpack.c.l.b16 %v640
      %v744 = vunpack.c.l.b16 %v641
      %v745 = vunpack.c.l.b16 %v642
      %v746 = vunpack.c.l.b16 %v643
      %v747 = vunpack.c.l.b16 %v644
      %v748 = vunpack.c.l.b16 %v645
      %v749 = vunpack.c.l.b16 %v646
      %v750 = vunpack.c.l.b16 %v647
      %v751 = vunpack.c.l.b16 %v648
      %v752 = vunpack.c.l.b16 %v649
      %v753 = vunpack.c.l.b16 %v650
      %v754 = vunpack.c.l.b16 %v651
      %v755 = vunpack.c.l.b16 %v652
      %v756 = vunpack.c.l.b16 %v653
      %v757 = vunpack.c.l.b16 %v654
      %v758 = vunpack.c.l.b16 %v655
      %v759 = vpack.c.b16 %v712, %v711
      %v760 = vpack.c.b16 %v714, %v713
      %v761 = vpack.c.b16 %v716, %v715
      %v762 = vpack.c.b16 %v718, %v717
      %v763 = vpack.c.b16 %v720, %v719
      %v764 = vpack.c.b16 %v722, %v721
      %v765 = vpack.c.b16 %v724, %v723
      %v766 = vpack.c.b16 %v726, %v725
      %v767 = vpack.c.b16 %v728, %v727
      %v768 = vpack.c.b16 %v730, %v729
      %v769 = vpack.c.b16 %v732, %v731
      %v770 = vpack.c.b16 %v734, %v733
      %v771 = vpack.c.b16 %v736, %v735
      %v772 = vpack.c.b16 %v738, %v737
      %v773 = vpack.c.b16 %v740, %v739
      %v774 = vpack.c.b16 %v742, %v741
      %v775 = vpack.c.b16 %v744, %v743
      %v776 = vpack.c.b16 %v746, %v745
      %v777 = vpack.c.b16 %v748, %v747
      %v778 = vpack.c.b16 %v750, %v749
      %v779 = vpack.c.b16 %v752, %v751
      %v780 = vpack.c.b16 %v754, %v753
      %v781 = vpack.c.b16 %v756, %v755
      %v782 = vpack.c.b16 %v758, %v757
      %807 = vmatprep.subr.bf16.mxu0 0
      %808 = vmatpush1.bf16.msra.mxu0 %v759
      %809 = vmatprep.subr.bf16.mxu0 0
      %810 = vmatpush1.bf16.msra.mxu0 %v760
      %811 = vmatprep.subr.bf16.mxu0 0
      %812 = vmatpush1.bf16.msra.mxu0 %v761
      %813 = vmatprep.subr.bf16.mxu0 0
      %814 = vmatpush1.bf16.msra.mxu0 %v762
      %815 = vmatprep.subr.bf16.mxu0 0
      %816 = vmatpush1.bf16.msra.mxu0 %v763
      %817 = vmatprep.subr.bf16.mxu0 0
      %818 = vmatpush1.bf16.msra.mxu0 %v764
      %819 = vmatprep.subr.bf16.mxu0 0
      %820 = vmatpush1.bf16.msra.mxu0 %v765
      %821 = vmatprep.subr.bf16.mxu0 0
      %822 = vmatpush1.bf16.msra.mxu0 %v766
      %823 = vmatprep.subr.bf16.mxu0 0
      %824 = vmatpush1.bf16.msra.mxu0 %v767
      %825 = vmatprep.subr.bf16.mxu0 0
      %826 = vmatpush1.bf16.msra.mxu0 %v768
      %827 = vmatprep.subr.bf16.mxu0 0
      %828 = vmatpush1.bf16.msra.mxu0 %v769
      %829 = vmatprep.subr.bf16.mxu0 0
      %830 = vmatpush1.bf16.msra.mxu0 %v770
      %831 = vmatprep.subr.bf16.mxu0 0
      %832 = vmatpush1.bf16.msra.mxu0 %v771
      %833 = vmatprep.subr.bf16.mxu0 0
      %834 = vmatpush1.bf16.msra.mxu0 %v772
      %835 = vmatprep.subr.bf16.mxu0 0
      %836 = vmatpush1.bf16.msra.mxu0 %v773
      %837 = vmatprep.subr.bf16.mxu0 0
      %838 = vmatpush1.bf16.msra.mxu0 %v774
      %839 = vmatprep.mubr.bf16.mxu0 %v606
      %840 = vmatmul.mubr.bf16.gmra.mrb[0].mxu0 %v605
      %v841 = vpop.f32.mrb[0].mxu0
      %v842 = vadd.f32 %v661, %v841
      %v843 = vpop.f32.mrb[0].mxu0
      %v844 = vpop.f32.mrb[0].mxu0
      %v845 = vadd.f32 %v661, %v844
      %v846 = vpop.f32.mrb[0].mxu0
      %847 = vdwg.mxu0
      %848 = vmatprep.subr.bf16.mxu0 0
      %849 = vmatpush1.bf16.msra.mxu0 %v775
      %850 = vmatprep.subr.bf16.mxu0 0
      %851 = vmatpush1.bf16.msra.mxu0 %v776
      %852 = vmatprep.subr.bf16.mxu0 0
      %853 = vmatpush1.bf16.msra.mxu0 %v777
      %854 = vmatprep.subr.bf16.mxu0 0
      %855 = vmatpush1.bf16.msra.mxu0 %v778
      %856 = vmatprep.subr.bf16.mxu0 0
      %857 = vmatpush1.bf16.msra.mxu0 %v779
      %858 = vmatprep.subr.bf16.mxu0 0
      %859 = vmatpush1.bf16.msra.mxu0 %v780
      %860 = vmatprep.subr.bf16.mxu0 0
      %861 = vmatpush1.bf16.msra.mxu0 %v781
      %862 = vmatprep.subr.bf16.mxu0 0
      %863 = vmatpush1.bf16.msra.mxu0 %v782
      %864 = vmatprep.subr.bf16.mxu0 0
      %865 = vmatpush1.bf16.msra.mxu0 0
      %866 = vmatprep.subr.bf16.mxu0 0
      %867 = vmatpush1.bf16.msra.mxu0 0
      %868 = vmatprep.subr.bf16.mxu0 0
      %869 = vmatpush1.bf16.msra.mxu0 0
      %870 = vmatprep.subr.bf16.mxu0 0
      %871 = vmatpush1.bf16.msra.mxu0 0
      %872 = vmatprep.subr.bf16.mxu0 0
      %873 = vmatpush1.bf16.msra.mxu0 0
      %874 = vmatprep.subr.bf16.mxu0 0
      %875 = vmatpush1.bf16.msra.mxu0 0
      %876 = vmatprep.subr.bf16.mxu0 0
      %877 = vmatpush1.bf16.msra.mxu0 0
      %878 = vmatprep.subr.bf16.mxu0 0
      %879 = vmatpush1.bf16.msra.mxu0 0
      %880 = vmatprep.mubr.bf16.mxu0 0
      %881 = vmatmul.mubr.bf16.gmra.mrb[0].mxu0 %v607
      %v882 = vpop.f32.mrb[0].mxu0
      %v883 = vadd.f32 %v842, %v882
      %v884 = vpop.f32.mrb[0].mxu0
      %v885 = vpop.f32.mrb[0].mxu0
      %v886 = vadd.f32 %v845, %v885
      %v887 = vpop.f32.mrb[0].mxu0
      %888 = vdwg.mxu0
      %v889 = vadd.f32 %v883, %v581
      %v890 = vadd.f32 %v886, %v585
      %v891 = vmax.f32 %v889, 0.0
      %v892 = vmax.f32 %v890, 0.0
      %893 = vst [vmem:[%s224] sm:$0xff] %v891
      %894 = vst [vmem:[%s224 + $0x8] sm:$0xff] %v892
      %p895 = scmp.lt.s32.totalorder %s16, 1
      %s896 = scalar_select %p895, %s16, 1
      %s897 = smul.addr %s896, 2
      %s898 = smul.addr %s897, 8
      %s899 = scalar_lea.vmem %s5, %s898
      // Predicated region
      $region41: #{gudi_upproj_block_forward.1} parent=39 // pred_check
        %p900 = pneg %p144
      $region42: #{gudi_upproj_block_forward.1} parent=39 // pred_check_branch
        %902 = sbr.rel (%p900) target = $region44
      $region43: #{gudi_upproj_block_forward.1} parent=39 // pred_region
        _
      $region44: #{gudi_upproj_block_forward.1} parent=39 // pred_fallthru
        _
    $region40: #{gudi_upproj_block_forward.1} parent=5 // pred_fallthru
      _
    %p903 = scmp.le.s32.totalorder 2, %s11
    // Predicated region
    $region45: #{gudi_upproj_block_forward.1} parent=5 // pred_check
      %p904 = pneg %p903
    $region46: #{gudi_upproj_block_forward.1} parent=5 // pred_check_branch
      %906 = sbr.rel (%p904) target = $region48
    $region47: #{gudi_upproj_block_forward.1} parent=5 // pred_region
      %s907 = ssub.s32 %s11, 2
      // Predicated region
      $region49: #{gudi_upproj_block_forward.1} parent=47 // pred_check
        %p908 = pneg %p150
      $region50: #{gudi_upproj_block_forward.1} parent=47 // pred_check_branch
        %910 = sbr.rel (%p908) target = $region52
      $region51: #{gudi_upproj_block_forward.1} parent=47 // pred_region
        %p911 = scmp.lt.s32.totalorder %s17, 1
        %s912 = scalar_select %p911, %s17, 1
        %s913 = smul.addr %s912, 2
        %s914 = smul.addr %s913, 8
        %s915 = scalar_lea.vmem %s5, %s914
      $region52: #{gudi_upproj_block_forward.1} parent=47 // pred_fallthru
        _
    $region48: #{gudi_upproj_block_forward.1} parent=5 // pred_fallthru
      _
  $region6: #{gudi_upproj_block_forward.1} parent=0 // loop_footer
    %s15 = sadd.s32 1, %s11
  $region7: #{gudi_upproj_block_forward.1} parent=0 // loop_footer_branch
    %10 = sbr.rel target = $region3
  $region8: #{gudi_upproj_block_forward.1} parent=0 // loop_exit
    _

</llo_original>
